<compile_context>
chip_gen: v7x
topology: tpu7x:2x2x1
jax: 0.10.0
libtpu: 0.0.40
codegen_flags: <defaults>
</compile_context>

<pallas_src>
import functools

import jax
import jax.numpy as jnp
from jax.experimental import pallas as pl
from jax.experimental.pallas import tpu as pltpu

ALPHA = 1.0
GAMMA = 5.0      # integer-valued -> unrolled as x^5 (matches torch.pow up to fp rounding)
EPS = 1e-7
IOU_EPS = 1e-6
LANES = 128
MAX_TILE_R = 512  # 8*512*128*4B ~= 2 MiB input block; ~6 MiB double-buffered total
                  # -> fits v7x's 32 MiB scoped / 64 MiB physical VMEM with headroom.


def _focal_iou_kernel(boxes_ref, mid_ref, part_ref, *, n_valid):
    """boxes_ref: (8, TILE_R, 128); mid_ref: (4, TILE_R, 128); part_ref: (2, 128)."""
    i = pl.program_id(0)
    tile_r = boxes_ref.shape[1]

    # Coordinate planes, each (TILE_R, 128): lane- and sublane-dense VPU work.
    b1x1 = boxes_ref[0].astype(jnp.float32)
    b1y1 = boxes_ref[1].astype(jnp.float32)
    b1x2 = boxes_ref[2].astype(jnp.float32)
    b1y2 = boxes_ref[3].astype(jnp.float32)
    b2x1 = boxes_ref[4].astype(jnp.float32)
    b2y1 = boxes_ref[5].astype(jnp.float32)
    b2x2 = boxes_ref[6].astype(jnp.float32)
    b2y2 = boxes_ref[7].astype(jnp.float32)

    # --- intersection over union (pure VPU elementwise) ---
    x1 = jnp.maximum(b1x1, b2x1)
    y1 = jnp.maximum(b1y1, b2y1)
    x2 = jnp.minimum(b1x2, b2x2)
    y2 = jnp.minimum(b1y2, b2y2)
    inter = jnp.maximum(x2 - x1, 0.0) * jnp.maximum(y2 - y1, 0.0)
    area1 = jnp.abs((b1x2 - b1x1) * (b1y2 - b1y1))
    area2 = jnp.abs((b2x2 - b2x1) * (b2y2 - b2y1))
    iou = inter / (area1 + area2 - inter + IOU_EPS)

    # --- focal term: (1 - iou) ** gamma, gamma = 5 unrolled; log on EUP ---
    one_m = 1.0 - iou
    p2 = one_m * one_m
    focal = (-ALPHA) * (p2 * p2 * one_m) * jnp.log(iou + EPS)

    # --- mask padded tail boxes, then per-block partial sums (sublane reduce) ---
    r = jax.lax.broadcasted_iota(jnp.int32, iou.shape, 0)
    l = jax.lax.broadcasted_iota(jnp.int32, iou.shape, 1)
    idx = (i * tile_r + r) * LANES + l
    valid = idx < n_valid
    iou_m = jnp.where(valid, iou, 0.0)
    focal_m = jnp.where(valid, focal, 0.0)
    part_ref[...] = jnp.concatenate(
        [jnp.sum(iou_m, axis=0, keepdims=True),
         jnp.sum(focal_m, axis=0, keepdims=True)],
        axis=0,
    )

    # --- box midpoints (lane-dense full-tile stores) ---
    mid_ref[0] = b1x1 + (b1x2 - b1x1) * 0.5
    mid_ref[1] = b1y1 + (b1y2 - b1y1) * 0.5
    mid_ref[2] = b2x1 + (b2x2 - b2x1) * 0.5
    mid_ref[3] = b2y1 + (b2y2 - b2y1) * 0.5


def focal_iou_loss(predicted_boxes, target_boxes):
    """predicted_boxes: (B, 4); target_boxes: (B, 1, 4) (flattened like torch)."""
    tgt_flat = target_boxes.reshape(-1, target_boxes.shape[-1])   # torch flatten(end_dim=1)
    pred = predicted_boxes
    b = pred.shape[0]

    # --- coordinate-major packing (layout plumbing, stays in caller's dtype) ---
    rows_needed = pl.cdiv(b, LANES)
    tile_r = min(MAX_TILE_R, max(8, ((rows_needed + 7) // 8) * 8))
    n_blocks = pl.cdiv(rows_needed, tile_r)
    r_total = n_blocks * tile_r
    b_pad = r_total * LANES

    packed = jnp.concatenate([pred.T, tgt_flat.T], axis=0)        # (8, B)
    if b_pad != b:
        packed = jnp.pad(packed, ((0, 0), (0, b_pad - b)))
    packed3 = packed.reshape(8, r_total, LANES)                   # (8, R, 128)

    kernel = functools.partial(_focal_iou_kernel, n_valid=b)
    mid, partials = pl.pallas_call(
        kernel,
        out_shape=(
            jax.ShapeDtypeStruct((4, r_total, LANES), jnp.float32),     # midpoints
            jax.ShapeDtypeStruct((2, n_blocks * LANES), jnp.float32),   # partial sums
        ),
        grid=(n_blocks,),
        in_specs=[pl.BlockSpec((8, tile_r, LANES), lambda i: (0, i, 0))],
        out_specs=(
            pl.BlockSpec((4, tile_r, LANES), lambda i: (0, i, 0)),
            pl.BlockSpec((2, LANES), lambda i: (0, i)),
        ),
        compiler_params=pltpu.CompilerParams(
            dimension_semantics=("parallel",),
        ),
    )(packed3)

    # --- tiny final reduction + unpack (plain XLA) ---
    iou_mean = jnp.sum(partials[0]) / b
    focal_mean = jnp.sum(partials[1]) / b

    mid_flat = mid.reshape(4, b_pad)[:, :b]                       # (4, B)
    pred_pt = mid_flat[0:2].T                                     # (B, 2)
    tgt_pt = mid_flat[2:4].T                                      # (B, 2)

    loss = {"iou_loss": iou_mean, "focal_loss": focal_mean}
    memory = {
        "points": {"target": tgt_pt, "pred": pred_pt},
        "box": {"target": tgt_flat, "pred": pred},
    }
    return loss, memory


def _reference(predicted_boxes, target_boxes):
    """Pure-JAX mirror of the PyTorch module (for the self-check)."""
    tgt = target_boxes.reshape(-1, target_boxes.shape[-1]).astype(jnp.float32)
    prd = predicted_boxes.astype(jnp.float32)
    x1 = jnp.maximum(prd[:, 0:1], tgt[:, 0:1])
    y1 = jnp.maximum(prd[:, 1:2], tgt[:, 1:2])
    x2 = jnp.minimum(prd[:, 2:3], tgt[:, 2:3])
    y2 = jnp.minimum(prd[:, 3:4], tgt[:, 3:4])
    inter = jnp.clip(x2 - x1, 0.0) * jnp.clip(y2 - y1, 0.0)
    a1 = jnp.abs((prd[:, 2:3] - prd[:, 0:1]) * (prd[:, 3:4] - prd[:, 1:2]))
    a2 = jnp.abs((tgt[:, 2:3] - tgt[:, 0:1]) * (tgt[:, 3:4] - tgt[:, 1:2]))
    iou = inter / (a1 + a2 - inter + IOU_EPS)
    focal = -ALPHA * (1.0 - iou) ** GAMMA * jnp.log(iou + EPS)
    pred_pt = prd[:, 0:2] + (prd[:, 2:4] - prd[:, 0:2]) / 2
    tgt_pt = tgt[:, 0:2] + (tgt[:, 2:4] - tgt[:, 0:2]) / 2
    return jnp.mean(iou), jnp.mean(focal), pred_pt, tgt_pt


if __name__ == "__main__":
    key = jax.random.PRNGKey(0)
    k1, k2, k3, k4 = jax.random.split(key, 4)
    B = 64  # small batch; kernel pads/masks up to the lane-aligned block internally

    # build valid (x1, y1, x2, y2) boxes in [0, 1]
    p_xy = jax.random.uniform(k1, (B, 2), minval=0.0, maxval=0.5)
    p_wh = jax.random.uniform(k2, (B, 2), minval=0.1, maxval=0.5)
    predicted_boxes = jnp.concatenate([p_xy, p_xy + p_wh], axis=-1)           # (B, 4)

    t_xy = jax.random.uniform(k3, (B, 2), minval=0.0, maxval=0.5)
    t_wh = jax.random.uniform(k4, (B, 2), minval=0.1, maxval=0.5)
    target_boxes = jnp.concatenate([t_xy, t_xy + t_wh], axis=-1)[:, None, :]  # (B, 1, 4)

    loss, memory = focal_iou_loss(predicted_boxes, target_boxes)
    jax.block_until_ready(loss["focal_loss"])
    jax.block_until_ready(loss["iou_loss"])
    jax.block_until_ready(memory["points"]["pred"])

    # lightweight correctness self-check against the pure-JAX reference
    ref_iou, ref_focal, ref_ppt, ref_tpt = _reference(predicted_boxes, target_boxes)
    assert abs(float(loss["iou_loss"]) - float(ref_iou)) < 1e-3
    assert abs(float(loss["focal_loss"]) - float(ref_focal)) < 1e-3
    assert bool(jnp.allclose(memory["points"]["pred"], ref_ppt, atol=1e-5))
    assert bool(jnp.allclose(memory["points"]["target"], ref_tpt, atol=1e-5))

    print("KERNEL_OK")
</pallas_src>

<mosaic_0001>
module attributes {stable_mosaic.version = 11 : i64} {
  func.func @_focal_iou_kernel(%arg0: i32, %arg1: memref<8x8x128xf32, #tpu.memory_space<vmem>>, %arg2: memref<4x8x128xf32, #tpu.memory_space<vmem>>, %arg3: memref<2x128xf32, #tpu.memory_space<vmem>>) attributes {dimension_semantics = [#tpu.dimension_semantics<parallel>], iteration_bounds = array<i64: 1>, scalar_prefetch = 0 : i64, scratch_operands = 0 : i64, tpu.core_type = #tpu.core_type<tc>, window_params = [{transform_indices = @transform_0, window_bounds = array<i64: 8, 8, 128>}, {transform_indices = @transform_1, window_bounds = array<i64: 4, 8, 128>}, {transform_indices = @transform_2, window_bounds = array<i64: 2, 128>}]} {
    %c0 = arith.constant 0 : index
    %c0_0 = arith.constant 0 : index
    %c0_1 = arith.constant 0 : index
    %0 = vector.load %arg1[%c0, %c0_0, %c0_1] : memref<8x8x128xf32, #tpu.memory_space<vmem>>, vector<1x8x128xf32>
    %1 = vector.shape_cast %0 : vector<1x8x128xf32> to vector<8x128xf32>
    %c1 = arith.constant 1 : index
    %c0_2 = arith.constant 0 : index
    %c0_3 = arith.constant 0 : index
    %2 = vector.load %arg1[%c1, %c0_2, %c0_3] : memref<8x8x128xf32, #tpu.memory_space<vmem>>, vector<1x8x128xf32>
    %3 = vector.shape_cast %2 : vector<1x8x128xf32> to vector<8x128xf32>
    %c2 = arith.constant 2 : index
    %c0_4 = arith.constant 0 : index
    %c0_5 = arith.constant 0 : index
    %4 = vector.load %arg1[%c2, %c0_4, %c0_5] : memref<8x8x128xf32, #tpu.memory_space<vmem>>, vector<1x8x128xf32>
    %5 = vector.shape_cast %4 : vector<1x8x128xf32> to vector<8x128xf32>
    %c3 = arith.constant 3 : index
    %c0_6 = arith.constant 0 : index
    %c0_7 = arith.constant 0 : index
    %6 = vector.load %arg1[%c3, %c0_6, %c0_7] : memref<8x8x128xf32, #tpu.memory_space<vmem>>, vector<1x8x128xf32>
    %7 = vector.shape_cast %6 : vector<1x8x128xf32> to vector<8x128xf32>
    %c4 = arith.constant 4 : index
    %c0_8 = arith.constant 0 : index
    %c0_9 = arith.constant 0 : index
    %8 = vector.load %arg1[%c4, %c0_8, %c0_9] : memref<8x8x128xf32, #tpu.memory_space<vmem>>, vector<1x8x128xf32>
    %9 = vector.shape_cast %8 : vector<1x8x128xf32> to vector<8x128xf32>
    %c5 = arith.constant 5 : index
    %c0_10 = arith.constant 0 : index
    %c0_11 = arith.constant 0 : index
    %10 = vector.load %arg1[%c5, %c0_10, %c0_11] : memref<8x8x128xf32, #tpu.memory_space<vmem>>, vector<1x8x128xf32>
    %11 = vector.shape_cast %10 : vector<1x8x128xf32> to vector<8x128xf32>
    %c6 = arith.constant 6 : index
    %c0_12 = arith.constant 0 : index
    %c0_13 = arith.constant 0 : index
    %12 = vector.load %arg1[%c6, %c0_12, %c0_13] : memref<8x8x128xf32, #tpu.memory_space<vmem>>, vector<1x8x128xf32>
    %13 = vector.shape_cast %12 : vector<1x8x128xf32> to vector<8x128xf32>
    %c7 = arith.constant 7 : index
    %c0_14 = arith.constant 0 : index
    %c0_15 = arith.constant 0 : index
    %14 = vector.load %arg1[%c7, %c0_14, %c0_15] : memref<8x8x128xf32, #tpu.memory_space<vmem>>, vector<1x8x128xf32>
    %15 = vector.shape_cast %14 : vector<1x8x128xf32> to vector<8x128xf32>
    %16 = arith.maximumf %1, %9 : vector<8x128xf32>
    %17 = arith.maximumf %3, %11 : vector<8x128xf32>
    %18 = arith.minimumf %5, %13 : vector<8x128xf32>
    %19 = arith.minimumf %7, %15 : vector<8x128xf32>
    %20 = arith.subf %18, %16 : vector<8x128xf32>
    %cst = arith.constant 0.000000e+00 : f32
    %21 = vector.broadcast %cst : f32 to vector<8x128xf32>
    %22 = arith.maximumf %20, %21 : vector<8x128xf32>
    %23 = arith.subf %19, %17 : vector<8x128xf32>
    %cst_16 = arith.constant 0.000000e+00 : f32
    %24 = vector.broadcast %cst_16 : f32 to vector<8x128xf32>
    %25 = arith.maximumf %23, %24 : vector<8x128xf32>
    %26 = arith.mulf %22, %25 : vector<8x128xf32>
    %27 = arith.subf %5, %1 : vector<8x128xf32>
    %28 = arith.subf %7, %3 : vector<8x128xf32>
    %29 = arith.mulf %27, %28 : vector<8x128xf32>
    %30 = math.absf %29 : vector<8x128xf32>
    %31 = arith.subf %13, %9 : vector<8x128xf32>
    %32 = arith.subf %15, %11 : vector<8x128xf32>
    %33 = arith.mulf %31, %32 : vector<8x128xf32>
    %34 = math.absf %33 : vector<8x128xf32>
    %35 = arith.addf %30, %34 : vector<8x128xf32>
    %36 = arith.subf %35, %26 : vector<8x128xf32>
    %cst_17 = arith.constant 9.99999997E-7 : f32
    %37 = vector.broadcast %cst_17 : f32 to vector<8x128xf32>
    %38 = arith.addf %36, %37 : vector<8x128xf32>
    %39 = arith.divf %26, %38 : vector<8x128xf32>
    %cst_18 = arith.constant 1.000000e+00 : f32
    %40 = vector.broadcast %cst_18 : f32 to vector<8x128xf32>
    %41 = arith.subf %40, %39 : vector<8x128xf32>
    %42 = arith.mulf %41, %41 : vector<8x128xf32>
    %43 = arith.mulf %42, %42 : vector<8x128xf32>
    %44 = arith.mulf %43, %41 : vector<8x128xf32>
    %cst_19 = arith.constant -1.000000e+00 : f32
    %45 = vector.broadcast %cst_19 : f32 to vector<8x128xf32>
    %46 = arith.mulf %45, %44 : vector<8x128xf32>
    %cst_20 = arith.constant 1.000000e-07 : f32
    %47 = vector.broadcast %cst_20 : f32 to vector<8x128xf32>
    %48 = arith.addf %39, %47 : vector<8x128xf32>
    %49 = math.log %48 : vector<8x128xf32>
    %50 = arith.mulf %46, %49 : vector<8x128xf32>
    %51 = tpu.iota {dimensions = array<i32: 0>} : vector<8x128xi32>
    %52 = tpu.iota {dimensions = array<i32: 1>} : vector<8x128xi32>
    %c8_i32 = arith.constant 8 : i32
    %53 = arith.muli %arg0, %c8_i32 : i32
    %54 = vector.broadcast %53 : i32 to vector<8x128xi32>
    %55 = arith.addi %54, %51 : vector<8x128xi32>
    %c128_i32 = arith.constant 128 : i32
    %56 = vector.broadcast %c128_i32 : i32 to vector<8x128xi32>
    %57 = arith.muli %55, %56 : vector<8x128xi32>
    %58 = arith.addi %57, %52 : vector<8x128xi32>
    %c64_i32 = arith.constant 64 : i32
    %59 = vector.broadcast %c64_i32 : i32 to vector<8x128xi32>
    %60 = arith.cmpi slt, %58, %59 : vector<8x128xi32>
    %cst_21 = arith.constant 0.000000e+00 : f32
    %61 = vector.broadcast %cst_21 : f32 to vector<8x128xf32>
    %62 = arith.select %60, %39, %61 : vector<8x128xi1>, vector<8x128xf32>
    %cst_22 = arith.constant 0.000000e+00 : f32
    %63 = vector.broadcast %cst_22 : f32 to vector<8x128xf32>
    %64 = arith.select %60, %50, %63 : vector<8x128xi1>, vector<8x128xf32>
    %cst_23 = arith.constant dense<0.000000e+00> : vector<128xf32>
    %65 = vector.multi_reduction <add>, %62, %cst_23 [0] : vector<8x128xf32> to vector<128xf32>
    %66 = vector.shape_cast %65 : vector<128xf32> to vector<1x128xf32>
    %cst_24 = arith.constant dense<0.000000e+00> : vector<128xf32>
    %67 = vector.multi_reduction <add>, %64, %cst_24 [0] : vector<8x128xf32> to vector<128xf32>
    %68 = vector.shape_cast %67 : vector<128xf32> to vector<1x128xf32>
    %69 = tpu.concatenate %66, %68 in 0 : vector<1x128xf32>, vector<1x128xf32> -> vector<2x128xf32>
    %c0_25 = arith.constant 0 : index
    %c0_26 = arith.constant 0 : index
    %70 = vector.load %arg3[%c0_25, %c0_26] : memref<2x128xf32, #tpu.memory_space<vmem>>, vector<2x128xf32>
    tpu.vector_store %arg3[%c0_25, %c0_26], %69 {strides = array<i32>} : memref<2x128xf32, #tpu.memory_space<vmem>>, vector<2x128xf32>,
    %71 = arith.subf %5, %1 : vector<8x128xf32>
    %cst_27 = arith.constant 5.000000e-01 : f32
    %72 = vector.broadcast %cst_27 : f32 to vector<8x128xf32>
    %73 = arith.mulf %71, %72 : vector<8x128xf32>
    %74 = arith.addf %1, %73 : vector<8x128xf32>
    %c0_28 = arith.constant 0 : index
    %c0_29 = arith.constant 0 : index
    %c0_30 = arith.constant 0 : index
    %75 = vector.load %arg2[%c0_28, %c0_29, %c0_30] : memref<4x8x128xf32, #tpu.memory_space<vmem>>, vector<1x8x128xf32>
    %76 = vector.shape_cast %75 : vector<1x8x128xf32> to vector<8x128xf32>
    %77 = vector.shape_cast %74 : vector<8x128xf32> to vector<1x8x128xf32>
    tpu.vector_store %arg2[%c0_28, %c0_29, %c0_30], %77 {strides = array<i32>} : memref<4x8x128xf32, #tpu.memory_space<vmem>>, vector<1x8x128xf32>,
    %78 = arith.subf %7, %3 : vector<8x128xf32>
    %cst_31 = arith.constant 5.000000e-01 : f32
    %79 = vector.broadcast %cst_31 : f32 to vector<8x128xf32>
    %80 = arith.mulf %78, %79 : vector<8x128xf32>
    %81 = arith.addf %3, %80 : vector<8x128xf32>
    %c1_32 = arith.constant 1 : index
    %c0_33 = arith.constant 0 : index
    %c0_34 = arith.constant 0 : index
    %82 = vector.load %arg2[%c1_32, %c0_33, %c0_34] : memref<4x8x128xf32, #tpu.memory_space<vmem>>, vector<1x8x128xf32>
    %83 = vector.shape_cast %82 : vector<1x8x128xf32> to vector<8x128xf32>
    %84 = vector.shape_cast %81 : vector<8x128xf32> to vector<1x8x128xf32>
    tpu.vector_store %arg2[%c1_32, %c0_33, %c0_34], %84 {strides = array<i32>} : memref<4x8x128xf32, #tpu.memory_space<vmem>>, vector<1x8x128xf32>,
    %85 = arith.subf %13, %9 : vector<8x128xf32>
    %cst_35 = arith.constant 5.000000e-01 : f32
    %86 = vector.broadcast %cst_35 : f32 to vector<8x128xf32>
    %87 = arith.mulf %85, %86 : vector<8x128xf32>
    %88 = arith.addf %9, %87 : vector<8x128xf32>
    %c2_36 = arith.constant 2 : index
    %c0_37 = arith.constant 0 : index
    %c0_38 = arith.constant 0 : index
    %89 = vector.load %arg2[%c2_36, %c0_37, %c0_38] : memref<4x8x128xf32, #tpu.memory_space<vmem>>, vector<1x8x128xf32>
    %90 = vector.shape_cast %89 : vector<1x8x128xf32> to vector<8x128xf32>
    %91 = vector.shape_cast %88 : vector<8x128xf32> to vector<1x8x128xf32>
    tpu.vector_store %arg2[%c2_36, %c0_37, %c0_38], %91 {strides = array<i32>} : memref<4x8x128xf32, #tpu.memory_space<vmem>>, vector<1x8x128xf32>,
    %92 = arith.subf %15, %11 : vector<8x128xf32>
    %cst_39 = arith.constant 5.000000e-01 : f32
    %93 = vector.broadcast %cst_39 : f32 to vector<8x128xf32>
    %94 = arith.mulf %92, %93 : vector<8x128xf32>
    %95 = arith.addf %11, %94 : vector<8x128xf32>
    %c3_40 = arith.constant 3 : index
    %c0_41 = arith.constant 0 : index
    %c0_42 = arith.constant 0 : index
    %96 = vector.load %arg2[%c3_40, %c0_41, %c0_42] : memref<4x8x128xf32, #tpu.memory_space<vmem>>, vector<1x8x128xf32>
    %97 = vector.shape_cast %96 : vector<1x8x128xf32> to vector<8x128xf32>
    %98 = vector.shape_cast %95 : vector<8x128xf32> to vector<1x8x128xf32>
    tpu.vector_store %arg2[%c3_40, %c0_41, %c0_42], %98 {strides = array<i32>} : memref<4x8x128xf32, #tpu.memory_space<vmem>>, vector<1x8x128xf32>,
    return
  }
  func.func @transform_0(%arg0: i32) -> (i32, i32, i32) {
    %c0_i32 = arith.constant 0 : i32
    %c0_i32_0 = arith.constant 0 : i32
    %c0_i32_1 = arith.constant 0 : i32
    return %c0_i32, %arg0, %c0_i32_0 : i32, i32, i32
  }
  func.func @transform_1(%arg0: i32) -> (i32, i32, i32) {
    %c0_i32 = arith.constant 0 : i32
    %c0_i32_0 = arith.constant 0 : i32
    %c0_i32_1 = arith.constant 0 : i32
    return %c0_i32, %arg0, %c0_i32_0 : i32, i32, i32
  }
  func.func @transform_2(%arg0: i32) -> (i32, i32) {
    %c0_i32 = arith.constant 0 : i32
    %c0_i32_0 = arith.constant 0 : i32
    return %c0_i32, %arg0 : i32, i32
  }
}

</mosaic_0001>

<llo_original>
// kernel: tpu_custom_call.1
$region0: #{tpu_custom_call.1}
  #allocation0 [shape = 'u32[]', space=smem, size = 0x4, offset = 0x4, fixed_abs, tag = 'smem constant byte address 0x4 - core index']
  #allocation1 [shape = 'u32[144,128]{1,0:T(1,128)}', space=vmem, size = 0x12000, scoped, tag = 'internal scratch']
  %s0 = inlined_call_operand.hbm [shape: f32[8,8,128], index: 0, kind: input, shape index: {}]
  %s1 = inlined_call_operand.hbm [shape: f32[4,8,128], index: 1, kind: output, shape index: {0}]
  %s2 = inlined_call_operand.hbm [shape: f32[2,128], index: 2, kind: output, shape index: {1}]
  %3 = xla_tuple %s1, %s2
  %s4 = sld [smem:[#allocation0]]
  $region26: #{tpu_custom_call.1} parent=0
    _
  %s6 = ssub.s32 1, %s4
  %s7 = scalar_select 0, %s6, %s4
  $region1: #{tpu_custom_call.1} parent=0
    #allocation2 [shape = 'u8[32768]{0}', space=vmem, size = 0x8000, scoped, tag = 'input window, operand 0, single buffered']
    #allocation3 [shape = 's32[1]{0}', space=sflag, size = 0x4, scoped, tag = 'scoped memory for tpu_custom_call.1']
    #allocation4 [shape = 's32[1]{0}', space=sflag, size = 0x4, scoped, tag = 'scoped memory for tpu_custom_call.1']
    #allocation5 [shape = 'u8[16384]{0}', space=vmem, size = 0x4000, scoped, tag = 'output window, operand 0, single buffered']
    #allocation6 [shape = 'u8[1024]{0}', space=vmem, size = 0x400, scoped, tag = 'output window, operand 1, single buffered']
    #allocation7 [shape = 's32[1]{0}', space=sflag, size = 0x4, scoped, tag = 'scoped memory for tpu_custom_call.1']
    %8 = vsyncpa [#allocation3], 0
    %9 = vsyncpa [#allocation4], 0
    %10 = vsyncpa [#allocation7], 0
    // Predicated region
    $region2: #{tpu_custom_call.1} parent=1 // pred_check
      _
    $region3: #{tpu_custom_call.1} parent=1 // pred_check_branch
      %12 = sbr.rel (0) target = $region5
    $region4: #{tpu_custom_call.1} parent=1 // pred_region
      %s14 = ssub.s32 1024, 1024
      %15 = vsyncadd [#allocation3], %s14
      %s16 = sshll.u32 [#allocation2], 4
      %s17 = int_to_ptr.vmem [resolvable:$true] %s16
      %22 = dma.hbm_to_vmem [thread:$0]  %s0, 1024, %s17, [#allocation3], 128, 128, 8
    $region5: #{tpu_custom_call.1} parent=1 // pred_fallthru
      _
    // Predicated region
    $region6: #{tpu_custom_call.1} parent=1 // pred_check
      _
    $region7: #{tpu_custom_call.1} parent=1 // pred_check_branch
      %24 = sbr.rel (0) target = $region9
    $region8: #{tpu_custom_call.1} parent=1 // pred_region
      %25 = dma.done [#allocation3], 1024
    $region9: #{tpu_custom_call.1} parent=1 // pred_fallthru
      _
    %v26 = vld [vmem:[#allocation2] sm:$0xff]
    %s27 = scalar_lea.vmem [#allocation2], 8
    %v28 = vld [vmem:[%s27] sm:$0xff]
    %s29 = scalar_lea.vmem [#allocation2], 16
    %v30 = vld [vmem:[%s29] sm:$0xff]
    %s31 = scalar_lea.vmem [#allocation2], 24
    %v32 = vld [vmem:[%s31] sm:$0xff]
    %s33 = scalar_lea.vmem [#allocation2], 32
    %v34 = vld [vmem:[%s33] sm:$0xff]
    %s35 = scalar_lea.vmem [#allocation2], 40
    %v36 = vld [vmem:[%s35] sm:$0xff]
    %s37 = scalar_lea.vmem [#allocation2], 48
    %v38 = vld [vmem:[%s37] sm:$0xff]
    %s39 = scalar_lea.vmem [#allocation2], 56
    %v40 = vld [vmem:[%s39] sm:$0xff]
    %v41 = vmax.f32 %v26, %v34
    %v42 = vmax.f32 %v28, %v36
    %v43 = vmin.f32 %v30, %v38
    %v44 = vmin.f32 %v32, %v40
    %v45 = vsub.f32 %v43, %v41
    %v46 = vmax.f32 %v45, 0.0
    %v47 = vsub.f32 %v44, %v42
    %v48 = vmax.f32 %v47, 0.0
    %v49 = vmul.f32 %v46, %v48
    %v50 = vsub.f32 %v30, %v26
    %v51 = vsub.f32 %v32, %v28
    %v52 = vmul.f32 %v50, %v51
    %v53 = vand.u32 2147483647, %v52
    %v54 = vsub.f32 %v38, %v34
    %v55 = vsub.f32 %v40, %v36
    %v56 = vmul.f32 %v54, %v55
    %v57 = vand.u32 2147483647, %v56
    %v58 = vadd.f32 %v53, %v57
    %v59 = vsub.f32 %v58, %v49
    %v60 = vadd.f32 %v59, 1e-06
    %v61 = vrcp.pop %v60
    %v62 = vmul.f32 %v49, %v61
    %v63 = vsub.f32 1.0, %v62
    %v64 = vmul.f32 %v63, %v63
    %v65 = vmul.f32 %v64, %v64
    %v66 = vmul.f32 %v65, %v63
    %v67 = vmul.f32 %v66, -1.0
    %v68 = vadd.f32 %v62, 1e-07
    %v69 = vlog2.pop %v68
    %v70 = vmul.f32 %v69, 0.6931472
    %v71 = vmul.f32 %v67, %v70
    %v72 = vlaneseq
    %v73 = vshrl.u32 %v72, 7
    %v74 = vlaneseq
    %v75 = vand.u32 %v74, 127
    %s76 = smul.u32 0, 8
    %v77 = vstv %s76
    %v78 = vadd.s32 %v77, %v73
    %v79 = vmul.u32 %v78, 128
    %v80 = vadd.s32 %v79, %v75
    %vm81 = vcmp.lt.s32.totalorder %v80, 64
    %v82 = vsel %vm81, %v62, 0.0
    %v83 = vsel %vm81, %v71, 0.0
    %v84 = vrot.slane %v82, 4
    %v85 = vadd.f32 %v82, %v84
    %v86 = vrot.slane %v85, 2
    %v87 = vadd.f32 %v85, %v86
    %v88 = vrot.slane %v87, 1
    %v89 = vadd.f32 %v87, %v88
    %v90 = vrot.slane %v83, 4
    %v91 = vadd.f32 %v83, %v90
    %v92 = vrot.slane %v91, 2
    %v93 = vadd.f32 %v91, %v92
    %v94 = vrot.slane %v93, 1
    %v95 = vadd.f32 %v93, %v94
    %vm96 = vcmask 1040384
    %v97 = vsel %vm96, %v89, %v95
    %98 = vst [vmem:[#allocation6] sm:$0x3] %v97
    %v99 = vmul.f32 %v50, 0.5
    %v100 = vadd.f32 %v26, %v99
    %101 = vst [vmem:[#allocation5] sm:$0xff] %v100
    %v102 = vmul.f32 %v51, 0.5
    %v103 = vadd.f32 %v28, %v102
    %s104 = scalar_lea.vmem [#allocation5], 8
    %105 = vst [vmem:[%s104] sm:$0xff] %v103
    %v106 = vmul.f32 %v54, 0.5
    %v107 = vadd.f32 %v34, %v106
    %s108 = scalar_lea.vmem [#allocation5], 16
    %109 = vst [vmem:[%s108] sm:$0xff] %v107
    %v110 = vmul.f32 %v55, 0.5
    %v111 = vadd.f32 %v36, %v110
    %s112 = scalar_lea.vmem [#allocation5], 24
    %113 = vst [vmem:[%s112] sm:$0xff] %v111
    // Predicated region
    $region10: #{tpu_custom_call.1} parent=1 // pred_check
      _
    $region11: #{tpu_custom_call.1} parent=1 // pred_check_branch
      %115 = sbr.rel (0) target = $region13
    $region12: #{tpu_custom_call.1} parent=1 // pred_region
      %s117 = ssub.s32 512, 512
      %118 = vsyncadd [#allocation4], %s117
      %s119 = sshll.u32 [#allocation5], 4
      %s120 = int_to_ptr.vmem [resolvable:$true] %s119
      %125 = dma.vmem_to_hbm [thread:$0]  %s120, 512, %s1, [#allocation4], 128, 128, 8
    $region13: #{tpu_custom_call.1} parent=1 // pred_fallthru
      _
    // Predicated region
    $region14: #{tpu_custom_call.1} parent=1 // pred_check
      _
    $region15: #{tpu_custom_call.1} parent=1 // pred_check_branch
      %127 = sbr.rel (0) target = $region17
    $region16: #{tpu_custom_call.1} parent=1 // pred_region
      %s129 = ssub.s32 32, 32
      %130 = vsyncadd [#allocation7], %s129
      %s132 = sshll.u32 [#allocation6], 4
      %s133 = int_to_ptr.vmem [resolvable:$true] %s132
      %135 = dma.vmem_to_hbm [thread:$0]  %s133, 32, %s2, [#allocation7]
    $region17: #{tpu_custom_call.1} parent=1 // pred_fallthru
      _
    // Predicated region
    $region18: #{tpu_custom_call.1} parent=1 // pred_check
      _
    $region19: #{tpu_custom_call.1} parent=1 // pred_check_branch
      %137 = sbr.rel (0) target = $region21
    $region20: #{tpu_custom_call.1} parent=1 // pred_region
      %138 = dma.done [#allocation4], 512
    $region21: #{tpu_custom_call.1} parent=1 // pred_fallthru
      _
    // Predicated region
    $region22: #{tpu_custom_call.1} parent=1 // pred_check
      _
    $region23: #{tpu_custom_call.1} parent=1 // pred_check_branch
      %140 = sbr.rel (0) target = $region25
    $region24: #{tpu_custom_call.1} parent=1 // pred_region
      %141 = dma.done [#allocation7], 32
    $region25: #{tpu_custom_call.1} parent=1 // pred_fallthru
      _
    %142 = vsyncpa [#allocation3], 1
    %143 = vsyncpa [#allocation4], 1
    %144 = vsyncpa [#allocation7], 1

</llo_original>
